<compile_context>
chip_gen: v6e
topology: v6e:2x2x1
jax: 0.10.0
libtpu: 0.0.40
codegen_flags: <defaults>
</compile_context>

<pallas_src>
import functools

import jax
import jax.numpy as jnp
from jax import lax
from jax.experimental import pallas as pl
from jax.experimental.pallas import tpu as pltpu


def _round_up(x: int, m: int) -> int:
    return ((x + m - 1) // m) * m


def _seq_crit_kernel(lp_ref, tgt_ref, scale_ref, out_ref):
    """Grid = (row tiles ["parallel"], vocab tiles ["arbitrary" reduction])."""
    k = pl.program_id(1)
    tr, tv = lp_ref.shape                                  # Python ints

    @pl.when(k == 0)
    def _():
        out_ref[...] = jnp.zeros_like(out_ref)

    # Fused gather over this vocab tile: compare against the local lane iota,
    # select in the input dtype (no full-tile f32 cast), lane-reduce. At most
    # one element per row is selected, so the native-dtype sum is exact, and
    # garbage lanes/rows (edge blocks) are never read arithmetically.
    lp = lp_ref[...]                                       # (TR, TV) native dtype
    tgt_local = tgt_ref[...] - k * tv                      # (TR, 1) int32
    lane_ids = lax.broadcasted_iota(jnp.int32, (tr, tv), 1)
    sel = jnp.where(lane_ids == tgt_local, lp, jnp.zeros_like(lp))
    gathered = jnp.sum(sel, axis=1, keepdims=True).astype(jnp.float32)  # (TR, 1)

    out_ref[...] += gathered * scale_ref[...]              # per-row partial sums


@functools.partial(jax.jit, static_argnames=("neg_weight", "row_tile", "vocab_tile"))
def seq_model_criterion(logprobs, target, mask, neg_weight: float = 1.0,
                        row_tile: int = 256, vocab_tile: int = 4096):
    """logprobs: (n, T, V) float; target: (n, L) int; mask: (n, L) float."""
    n, t, v = logprobs.shape
    rows = n * t

    # Glue: truncate to effective length (mirrors the PyTorch slicing), flatten
    # (n, T) -> rows. reshape only; no copy / no upcast / no pad of logprobs.
    target_t = target[:, :t].reshape(rows, 1).astype(jnp.int32)
    mask_t = mask[:, :t].reshape(rows, 1).astype(jnp.float32)
    lp = logprobs.reshape(rows, v)

    # Tiny wrapper-side per-row scale and denominator (rows elements each).
    w = jnp.where(target_t == 0, jnp.float32(neg_weight), jnp.float32(1.0))
    scale = -(w * mask_t)                                  # (rows, 1) f32
    den = jnp.sum(mask_t)

    itemsize = lp.dtype.itemsize

    # Row tile: 8-aligned, modest (TR <= 512 recommended; vocab is the cheap axis).
    tr = min(_round_up(row_tile, 8), _round_up(rows, 8))
    rows_p = _round_up(rows, tr)

    # Vocab tile: 128-aligned, prefer an exact divisor of V (no partial edge
    # block); cap by a ~24 MiB per-buffer VMEM budget (v7x has 64 MiB VMEM).
    budget = 24 * 1024 * 1024
    v128 = _round_up(v, 128)
    tv_cap = max(128, min(_round_up(vocab_tile, 128), v128))
    tv_cap = max(128, min(tv_cap, (budget // (tr * itemsize)) // 128 * 128))
    tv = None
    for cand in range(tv_cap, 0, -128):
        if v % cand == 0:
            tv = cand
            break
    if tv is None:
        # No 128-multiple divides V: either one full-width block (block dim ==
        # array dim is always legal) or tiles with a masked partial edge block.
        tv = v if v <= tv_cap else tv_cap
    kv = pl.cdiv(v, tv)
    grid = (rows_p // tr, kv)

    if rows_p != rows:
        pad = rows_p - rows
        # Sentinel -1: padded rows never match any lane -> contribute exactly 0
        # (and padded scale is 0), so garbage OOB logprob rows cannot leak in.
        target_t = jnp.pad(target_t, ((0, pad), (0, 0)), constant_values=-1)
        scale = jnp.pad(scale, ((0, pad), (0, 0)))

    lp_tile_bytes = tr * tv * itemsize
    vmem_limit = int(min(64 * 1024 * 1024,
                         max(32 * 1024 * 1024, 2 * lp_tile_bytes + (4 << 20))))

    bytes_accessed = (grid[0] * kv * lp_tile_bytes   # streamed logprobs tiles
                      + rows_p * (4 + 4)             # target + scale (once / row tile)
                      + rows_p * 4)                  # per-row output writeback
    cost = pl.CostEstimate(flops=2 * grid[0] * tr * kv * tv,
                           transcendentals=0, bytes_accessed=bytes_accessed)

    out_rows = pl.pallas_call(
        _seq_crit_kernel,
        out_shape=jax.ShapeDtypeStruct((rows_p, 1), jnp.float32),
        grid_spec=pltpu.PrefetchScalarGridSpec(
            num_scalar_prefetch=0,
            grid=grid,
            in_specs=[
                pl.BlockSpec((tr, tv), lambda i, k: (i, k)),   # logprobs (streamed)
                pl.BlockSpec((tr, 1), lambda i, k: (i, 0)),    # target (row-resident)
                pl.BlockSpec((tr, 1), lambda i, k: (i, 0)),    # scale  (row-resident)
            ],
            out_specs=pl.BlockSpec((tr, 1), lambda i, k: (i, 0)),  # per-row partials
        ),
        compiler_params=pltpu.CompilerParams(
            dimension_semantics=("parallel", "arbitrary"),
            vmem_limit_bytes=vmem_limit),
        cost_estimate=cost,
    )(lp, target_t, scale)

    # Tiny final reductions + divide in the wrapper (padded rows are exact 0).
    num = jnp.sum(out_rows)
    return num / (den + jnp.float32(1e-6))


def _reference(logprobs, target, mask, neg_weight=1.0):
    t = logprobs.shape[1]
    target = target[:, :t]
    mask = mask[:, :t].astype(jnp.float32)
    weights = (target == 0).astype(jnp.float32) * neg_weight + (
        target != 0).astype(jnp.float32)
    gathered = jnp.take_along_axis(
        logprobs.astype(jnp.float32), target[..., None], axis=2)[..., 0]
    out = -gathered * weights * mask
    return jnp.sum(out) / (jnp.sum(mask) + 1e-6)


if __name__ == "__main__":
    key = jax.random.PRNGKey(0)
    keys = jax.random.split(key, 9)

    # --- Test 1: module-faithful small shapes (binary targets) -------------
    n, L, T, V = 2, 8, 6, 32
    logits = jax.random.normal(keys[0], (n, T, V), dtype=jnp.float32)
    logprobs = jax.nn.log_softmax(logits, axis=-1)
    target = jax.random.bernoulli(keys[1], 0.5, (n, L)).astype(jnp.int32)
    mask = jax.random.bernoulli(keys[2], 0.8, (n, L)).astype(jnp.float32)

    loss = seq_model_criterion(logprobs, target, mask, neg_weight=0.5)
    loss = jax.block_until_ready(loss)
    ref = _reference(logprobs, target, mask, neg_weight=0.5)
    assert jnp.allclose(loss, ref, atol=2e-5, rtol=2e-5), (loss, ref)

    # --- Test 2: multi-tile grid, unaligned rows + partial vocab edge block --
    n2, L2, T2, V2 = 3, 48, 40, 160
    logits2 = jax.random.normal(keys[3], (n2, T2, V2), dtype=jnp.float32)
    logprobs2 = jax.nn.log_softmax(logits2, axis=-1)
    target2 = jax.random.randint(keys[4], (n2, L2), 0, V2, dtype=jnp.int32)
    mask2 = jax.random.bernoulli(keys[5], 0.7, (n2, L2)).astype(jnp.float32)

    loss2 = seq_model_criterion(logprobs2, target2, mask2, neg_weight=0.25,
                                row_tile=64, vocab_tile=128)
    loss2 = jax.block_until_ready(loss2)
    ref2 = _reference(logprobs2, target2, mask2, neg_weight=0.25)
    assert jnp.allclose(loss2, ref2, atol=2e-5, rtol=2e-5), (loss2, ref2)

    # --- Test 3: bf16 logprobs (native-dtype select path, no wrapper upcast) --
    n3, L3, T3, V3 = 2, 20, 16, 384
    logits3 = jax.random.normal(keys[6], (n3, T3, V3), dtype=jnp.float32)
    logprobs3 = jax.nn.log_softmax(logits3, axis=-1).astype(jnp.bfloat16)
    target3 = jax.random.randint(keys[7], (n3, L3), 0, V3, dtype=jnp.int32)
    mask3 = jax.random.bernoulli(keys[8], 0.6, (n3, L3)).astype(jnp.float32)

    loss3 = seq_model_criterion(logprobs3, target3, mask3, neg_weight=2.0)
    loss3 = jax.block_until_ready(loss3)
    ref3 = _reference(logprobs3, target3, mask3, neg_weight=2.0)
    assert jnp.allclose(loss3, ref3, atol=1e-3, rtol=1e-4), (loss3, ref3)

    print("KERNEL_OK")
</pallas_src>

<mosaic_0001>
module attributes {stable_mosaic.version = 11 : i64} {
  func.func @_seq_crit_kernel(%arg0: i32, %arg1: i32, %arg2: memref<16x32xf32, #tpu.memory_space<vmem>>, %arg3: memref<16x1xi32, #tpu.memory_space<vmem>>, %arg4: memref<16x1xf32, #tpu.memory_space<vmem>>, %arg5: memref<16x1xf32, #tpu.memory_space<vmem>>) attributes {dimension_semantics = [#tpu.dimension_semantics<parallel>, #tpu.dimension_semantics<arbitrary>], iteration_bounds = array<i64: 1, 1>, scalar_prefetch = 0 : i64, scratch_operands = 0 : i64, tpu.core_type = #tpu.core_type<tc>, window_params = [{transform_indices = @transform_0, window_bounds = array<i64: 16, 32>}, {transform_indices = @transform_1, window_bounds = array<i64: 16, 1>}, {transform_indices = @transform_2, window_bounds = array<i64: 16, 1>}, {transform_indices = @transform_3, window_bounds = array<i64: 16, 1>}]} {
    %c0_i32 = arith.constant 0 : i32
    %0 = arith.cmpi eq, %arg1, %c0_i32 : i32
    %1 = arith.extui %0 : i1 to i32
    %c0_i32_0 = arith.constant 0 : i32
    %2 = arith.cmpi ne, %1, %c0_i32_0 : i32
    scf.if %2 {
      %cst_11 = arith.constant 0.000000e+00 : f32
      %20 = vector.broadcast %cst_11 : f32 to vector<16x1xf32>
      %c0_12 = arith.constant 0 : index
      %c0_13 = arith.constant 0 : index
      %21 = vector.load %arg5[%c0_12, %c0_13] : memref<16x1xf32, #tpu.memory_space<vmem>>, vector<16x1xf32>
      tpu.vector_store %arg5[%c0_12, %c0_13], %20 {strides = array<i32>} : memref<16x1xf32, #tpu.memory_space<vmem>>, vector<16x1xf32>,
    } else {
    }
    %c0 = arith.constant 0 : index
    %c0_1 = arith.constant 0 : index
    %3 = vector.load %arg2[%c0, %c0_1] : memref<16x32xf32, #tpu.memory_space<vmem>>, vector<16x32xf32>
    %c0_2 = arith.constant 0 : index
    %c0_3 = arith.constant 0 : index
    %4 = vector.load %arg3[%c0_2, %c0_3] : memref<16x1xi32, #tpu.memory_space<vmem>>, vector<16x1xi32>
    %c32_i32 = arith.constant 32 : i32
    %5 = arith.muli %arg1, %c32_i32 : i32
    %6 = vector.broadcast %5 : i32 to vector<16x1xi32>
    %7 = arith.subi %4, %6 : vector<16x1xi32>
    %8 = tpu.iota {dimensions = array<i32: 1>} : vector<16x32xi32>
    %9 = vector.broadcast %7 : vector<16x1xi32> to vector<16x32xi32>
    %10 = arith.cmpi eq, %8, %9 : vector<16x32xi32>
    %cst = arith.constant 0.000000e+00 : f32
    %11 = vector.broadcast %cst : f32 to vector<16x32xf32>
    %12 = arith.select %10, %3, %11 : vector<16x32xi1>, vector<16x32xf32>
    %cst_4 = arith.constant dense<0.000000e+00> : vector<16xf32>
    %13 = vector.multi_reduction <add>, %12, %cst_4 [1] : vector<16x32xf32> to vector<16xf32>
    %14 = vector.shape_cast %13 : vector<16xf32> to vector<16x1xf32>
    %c0_5 = arith.constant 0 : index
    %c0_6 = arith.constant 0 : index
    %15 = vector.load %arg5[%c0_5, %c0_6] : memref<16x1xf32, #tpu.memory_space<vmem>>, vector<16x1xf32>
    %c0_7 = arith.constant 0 : index
    %c0_8 = arith.constant 0 : index
    %16 = vector.load %arg4[%c0_7, %c0_8] : memref<16x1xf32, #tpu.memory_space<vmem>>, vector<16x1xf32>
    %17 = arith.mulf %14, %16 : vector<16x1xf32>
    %18 = arith.addf %15, %17 : vector<16x1xf32>
    %c0_9 = arith.constant 0 : index
    %c0_10 = arith.constant 0 : index
    %19 = vector.load %arg5[%c0_9, %c0_10] : memref<16x1xf32, #tpu.memory_space<vmem>>, vector<16x1xf32>
    tpu.vector_store %arg5[%c0_9, %c0_10], %18 {strides = array<i32>} : memref<16x1xf32, #tpu.memory_space<vmem>>, vector<16x1xf32>,
    return
  }
  func.func @transform_0(%arg0: i32, %arg1: i32) -> (i32, i32) {
    %c0_i32 = arith.constant 0 : i32
    return %arg0, %arg1 : i32, i32
  }
  func.func @transform_1(%arg0: i32, %arg1: i32) -> (i32, i32) {
    %c0_i32 = arith.constant 0 : i32
    %c0_i32_0 = arith.constant 0 : i32
    return %arg0, %c0_i32 : i32, i32
  }
  func.func @transform_2(%arg0: i32, %arg1: i32) -> (i32, i32) {
    %c0_i32 = arith.constant 0 : i32
    %c0_i32_0 = arith.constant 0 : i32
    return %arg0, %c0_i32 : i32, i32
  }
  func.func @transform_3(%arg0: i32, %arg1: i32) -> (i32, i32) {
    %c0_i32 = arith.constant 0 : i32
    %c0_i32_0 = arith.constant 0 : i32
    return %arg0, %c0_i32 : i32, i32
  }
}

</mosaic_0001>

<llo_original>
// kernel: seq_model_criterion.1
$region0: #{seq_model_criterion.1}
  #allocation0 [shape = 'u32[]', space=smem, size = 0x4, offset = 0x4, fixed_abs, tag = 'smem constant byte address 0x4 - core index']
  #allocation1 [shape = 'u32[144,128]{1,0:T(1,128)}', space=vmem, size = 0x12000, scoped, tag = 'internal scratch']
  %s0 = inlined_call_operand.vmem [shape: f32[12,32], index: 0, kind: input, shape index: {}]
  %s1 = inlined_call_operand.vmem [shape: s32[16,1], index: 1, kind: input, shape index: {}]
  %s2 = inlined_call_operand.vmem [shape: f32[16,1], index: 2, kind: input, shape index: {}]
  %s3 = inlined_call_operand.vmem [shape: f32[16,1], index: 3, kind: output, shape index: {}]
  %s4 = sld [smem:[#allocation0]]
  $region26: #{seq_model_criterion.1} parent=0
    _
  %s6 = ssub.s32 1, %s4
  %s7 = scalar_select 0, %s6, %s4
  // Predicated region
  $region2: #{seq_model_criterion.1} parent=0 // pred_check
    _
  $region3: #{seq_model_criterion.1} parent=0 // pred_check_branch
    %9 = sbr.rel (0) target = $region5
  $region4: #{seq_model_criterion.1} parent=0 // pred_region
    _
  $region5: #{seq_model_criterion.1} parent=0 // pred_fallthru
    _
  // Predicated region
  $region6: #{seq_model_criterion.1} parent=0 // pred_check
    _
  $region7: #{seq_model_criterion.1} parent=0 // pred_check_branch
    %11 = sbr.rel (0) target = $region9
  $region8: #{seq_model_criterion.1} parent=0 // pred_region
    _
  $region9: #{seq_model_criterion.1} parent=0 // pred_fallthru
    _
  // Predicated region
  $region10: #{seq_model_criterion.1} parent=0 // pred_check
    _
  $region11: #{seq_model_criterion.1} parent=0 // pred_check_branch
    %13 = sbr.rel (0) target = $region13
  $region12: #{seq_model_criterion.1} parent=0 // pred_region
    _
  $region13: #{seq_model_criterion.1} parent=0 // pred_fallthru
    _
  %p14 = scmp.eq.s32.totalorder 0, 0
  // Predicated region
  $region14: #{seq_model_criterion.1} parent=0 // pred_check
    %p15 = pneg %p14
  $region15: #{seq_model_criterion.1} parent=0 // pred_check_branch
    %17 = sbr.rel (%p15) target = $region17
  $region16: #{seq_model_criterion.1} parent=0 // pred_region
    %vm18 = vcmask 7168
    %19 = vst.msk [vmem:[%s3] sm:$0xff] %vm18, 0.0
    %20 = vst.msk [vmem:[%s3 + $0x8] sm:$0xff] %vm18, 0.0
  $region17: #{seq_model_criterion.1} parent=0 // pred_fallthru
    _
  %v21 = vld [vmem:[%s0] sm:$0xff]
  %v22 = vld [vmem:[%s0 + $0x8] sm:$0xff]
  %v23 = vld [vmem:[%s1] sm:$0xff]
  %v24 = vld [vmem:[%s1 + $0x8] sm:$0xff]
  %s25 = smul.u32 0, 32
  %v26 = vstv %s25
  %v27 = vsub.s32 %v23, %v26
  %v28 = vsub.s32 %v24, %v26
  %v29 = vlaneseq
  %v30 = vand.u32 %v29, 127
  %31 = vset.pattern.permute.xlu0 0
  %32 = vperm.xlu0 %31, %v27
  %v33 = vpop.permute.xlu0 %32
  %34 = vset.pattern.permute.xlu0 0
  %35 = vperm.xlu0 %34, %v28
  %v36 = vpop.permute.xlu0 %35
  %vm37 = vcmp.eq.s32.totalorder %v30, %v33
  %vm38 = vcmp.eq.s32.totalorder %v30, %v36
  %v39 = vsel %vm37, %v21, 0.0
  %v40 = vsel %vm38, %v22, 0.0
  %vm41 = vcmask 261120
  %v42 = vsel %vm41, %v39, 0.0
  %43 = vadd.xlane.f32.xlu0 %v42
  %v44 = vpop.xlane.xlu0 %43
  %v45 = vsel %vm41, %v40, 0.0
  %46 = vadd.xlane.f32.xlu0 %v45
  %v47 = vpop.xlane.xlu0 %46
  %v48 = vld [vmem:[%s3] sm:$0xff]
  %v49 = vld [vmem:[%s3 + $0x8] sm:$0xff]
  %v50 = vld [vmem:[%s2] sm:$0xff]
  %v51 = vld [vmem:[%s2 + $0x8] sm:$0xff]
  %v52 = vmul.f32 %v44, %v50
  %v53 = vmul.f32 %v47, %v51
  %v54 = vadd.f32 %v48, %v52
  %v55 = vadd.f32 %v49, %v53
  %vm56 = vcmask 7168
  %57 = vst.msk [vmem:[%s3] sm:$0xff] %vm56, %v54
  %58 = vst.msk [vmem:[%s3 + $0x8] sm:$0xff] %vm56, %v55
  // Predicated region
  $region18: #{seq_model_criterion.1} parent=0 // pred_check
    _
  $region19: #{seq_model_criterion.1} parent=0 // pred_check_branch
    %60 = sbr.rel (0) target = $region21
  $region20: #{seq_model_criterion.1} parent=0 // pred_region
    _
  $region21: #{seq_model_criterion.1} parent=0 // pred_fallthru
    _
  // Predicated region
  $region22: #{seq_model_criterion.1} parent=0 // pred_check
    _
  $region23: #{seq_model_criterion.1} parent=0 // pred_check_branch
    %62 = sbr.rel (0) target = $region25
  $region24: #{seq_model_criterion.1} parent=0 // pred_region
    _
  $region25: #{seq_model_criterion.1} parent=0 // pred_fallthru
    _

</llo_original>
